<compile_context>
chip_gen: v6e
topology: v6e:2x2x1
jax: 0.10.0
libtpu: 0.0.40
codegen_flags: <defaults>
</compile_context>

<pallas_src>
import jax
import jax.numpy as jnp
from jax.experimental import pallas as pl
from jax.experimental.pallas import tpu as pltpu

D_IN = 100     # logical input features
D_HID = 128    # hidden width
D_OUT = 100    # logical output features
D_PAD = 128    # lane-dense padded width for the 100-wide dims
TILE_B = 128   # batch rows per grid step


def qnet_kernel(x_ref, w1_ref, b1_ref, w2_ref, b2_ref, w3_ref, b3_ref, o_ref):
    # bf16 operands on the MXU, f32 accumulation; biases are f32 (1,128) and
    # broadcast once per tile (no in-kernel loop -> no repeated broadcasts).
    x = x_ref[...]                                                   # [TB,128] bf16
    h1 = jnp.dot(x, w1_ref[...], preferred_element_type=jnp.float32) + b1_ref[...]
    h1 = jnp.maximum(h1, 0.0).astype(w2_ref.dtype)                   # relu -> bf16
    h2 = jnp.dot(h1, w2_ref[...], preferred_element_type=jnp.float32) + b2_ref[...]
    h2 = jnp.maximum(h2, 0.0).astype(w3_ref.dtype)                   # relu -> bf16
    out = jnp.dot(h2, w3_ref[...], preferred_element_type=jnp.float32) + b3_ref[...]
    o_ref[...] = out.astype(o_ref.dtype)                             # [TB,128] f32


def _pad_to(a, shape):
    return jnp.pad(a, [(0, t - s) for s, t in zip(a.shape, shape)])


def qnet_forward(x, params):
    """x: [B, 100] f32, params: (w1[100,128], b1[1,128], w2[128,128], b2[1,128],
    w3[128,100], b3[1,100]).  Returns [B, 100] f32."""
    w1, b1, w2, b2, w3, b3 = params
    B = x.shape[0]
    Bp = pl.cdiv(B, TILE_B) * TILE_B

    # Zero-pad the 100-wide dims to 128 and the batch to a tile multiple.
    # Padding is exact: padded x lanes hit zero W1 rows; W3's padded columns
    # and b3's padded lanes are zero, and those lanes are sliced off below.
    xp = _pad_to(x, (Bp, D_PAD)).astype(jnp.bfloat16)
    w1p = _pad_to(w1, (D_PAD, D_HID)).astype(jnp.bfloat16)
    w2p = w2.astype(jnp.bfloat16)
    w3p = _pad_to(w3, (D_HID, D_PAD)).astype(jnp.bfloat16)
    b1p = b1.astype(jnp.float32)
    b2p = b2.astype(jnp.float32)
    b3p = _pad_to(b3, (1, D_PAD)).astype(jnp.float32)

    const = lambda shape: pl.BlockSpec(shape, lambda i: (0, 0))  # VMEM-resident

    out = pl.pallas_call(
        qnet_kernel,
        out_shape=jax.ShapeDtypeStruct((Bp, D_PAD), jnp.float32),
        grid=(Bp // TILE_B,),
        in_specs=[
            pl.BlockSpec((TILE_B, D_PAD), lambda i: (i, 0)),     # x: tiled on batch
            const((D_PAD, D_HID)), const((1, D_HID)),            # fc1
            const((D_HID, D_HID)), const((1, D_HID)),            # fc2
            const((D_HID, D_PAD)), const((1, D_PAD)),            # fc3
        ],
        out_specs=pl.BlockSpec((TILE_B, D_PAD), lambda i: (i, 0)),
        compiler_params=pltpu.CompilerParams(
            dimension_semantics=("parallel",)),                   # megacore on v7x
    )(xp, w1p, b1p, w2p, b2p, w3p, b3p)

    return out[:B, :D_OUT]


def init_qnet_params(key):
    """Deterministic init mimicking nn.Linear default (uniform +-1/sqrt(fan_in)).
    Weights stored as [in, out] (== PyTorch weight.T), biases as [1, out]."""
    dims = [(D_IN, D_HID), (D_HID, D_HID), (D_HID, D_OUT)]
    params = []
    for fan_in, fan_out in dims:
        kw, kb, key = jax.random.split(key, 3)
        bound = 1.0 / jnp.sqrt(jnp.float32(fan_in))
        w = jax.random.uniform(kw, (fan_in, fan_out), jnp.float32, -bound, bound)
        b = jax.random.uniform(kb, (1, fan_out), jnp.float32, -bound, bound)
        params += [w, b]
    return tuple(params)


def qnet_reference(x, params, compute_dtype):
    """Plain-JAX reference with the same compute precision as the kernel."""
    w1, b1, w2, b2, w3, b3 = params
    xc = x.astype(compute_dtype)
    h1 = jnp.maximum(
        jnp.dot(xc, w1.astype(compute_dtype), preferred_element_type=jnp.float32) + b1, 0.0)
    h2 = jnp.maximum(
        jnp.dot(h1.astype(compute_dtype), w2.astype(compute_dtype),
                preferred_element_type=jnp.float32) + b2, 0.0)
    return jnp.dot(h2.astype(compute_dtype), w3.astype(compute_dtype),
                   preferred_element_type=jnp.float32) + b3


if __name__ == "__main__":
    key = jax.random.PRNGKey(0)
    kx, kp = jax.random.split(key)

    B = 8  # small batch of observations (kernel pads/grids to TILE_B internally)
    x = jax.random.normal(kx, (B, D_IN), jnp.float32)
    params = init_qnet_params(kp)

    out = qnet_forward(x, params)
    out = jax.block_until_ready(out)
    assert out.shape == (B, D_OUT)

    # 1) Tight check vs a reference using the same bf16 matmul precision.
    ref_bf16 = qnet_reference(x, params, jnp.bfloat16)
    assert jnp.allclose(out, ref_bf16, atol=1e-4, rtol=1e-4), \
        float(jnp.max(jnp.abs(out - ref_bf16)))

    # 2) Loose semantic check vs the full-f32 forward (bf16 rounding only).
    ref_f32 = qnet_reference(x, params, jnp.float32)
    assert jnp.allclose(out, ref_f32, atol=5e-2, rtol=5e-2), \
        float(jnp.max(jnp.abs(out - ref_f32)))

    print("KERNEL_OK")
</pallas_src>

<mosaic_0001>
module attributes {stable_mosaic.version = 11 : i64} {
  func.func @qnet_kernel(%arg0: i32, %arg1: memref<128x128xbf16, #tpu.memory_space<vmem>>, %arg2: memref<128x128xbf16, #tpu.memory_space<vmem>>, %arg3: memref<1x128xf32, #tpu.memory_space<vmem>>, %arg4: memref<128x128xbf16, #tpu.memory_space<vmem>>, %arg5: memref<1x128xf32, #tpu.memory_space<vmem>>, %arg6: memref<128x128xbf16, #tpu.memory_space<vmem>>, %arg7: memref<1x128xf32, #tpu.memory_space<vmem>>, %arg8: memref<128x128xf32, #tpu.memory_space<vmem>>) attributes {dimension_semantics = [#tpu.dimension_semantics<parallel>], iteration_bounds = array<i64: 1>, scalar_prefetch = 0 : i64, scratch_operands = 0 : i64, tpu.core_type = #tpu.core_type<tc>, window_params = [{transform_indices = @transform_0, window_bounds = array<i64: 128, 128>}, {pipeline_mode = #tpu.pipeline_mode<synchronous>, transform_indices = @transform_1, window_bounds = array<i64: 128, 128>}, {pipeline_mode = #tpu.pipeline_mode<synchronous>, transform_indices = @transform_2, window_bounds = array<i64: 1, 128>}, {pipeline_mode = #tpu.pipeline_mode<synchronous>, transform_indices = @transform_3, window_bounds = array<i64: 128, 128>}, {pipeline_mode = #tpu.pipeline_mode<synchronous>, transform_indices = @transform_4, window_bounds = array<i64: 1, 128>}, {pipeline_mode = #tpu.pipeline_mode<synchronous>, transform_indices = @transform_5, window_bounds = array<i64: 128, 128>}, {pipeline_mode = #tpu.pipeline_mode<synchronous>, transform_indices = @transform_6, window_bounds = array<i64: 1, 128>}, {transform_indices = @transform_7, window_bounds = array<i64: 128, 128>}]} {
    %c0 = arith.constant 0 : index
    %c0_0 = arith.constant 0 : index
    %0 = vector.load %arg1[%c0, %c0_0] : memref<128x128xbf16, #tpu.memory_space<vmem>>, vector<128x128xbf16>
    %c0_1 = arith.constant 0 : index
    %c0_2 = arith.constant 0 : index
    %1 = vector.load %arg2[%c0_1, %c0_2] : memref<128x128xbf16, #tpu.memory_space<vmem>>, vector<128x128xbf16>
    %cst = arith.constant dense<0.000000e+00> : vector<128x128xf32>
    %2 = tpu.matmul %0, %1, %cst {dimension_numbers = #tpu.dot_dimension_numbers<[1], [0], [0], [1], [0, 0, 1, 1], [], []>} : vector<128x128xbf16>, vector<128x128xbf16>, vector<128x128xf32> -> vector<128x128xf32>
    %c0_3 = arith.constant 0 : index
    %c0_4 = arith.constant 0 : index
    %3 = vector.load %arg3[%c0_3, %c0_4] : memref<1x128xf32, #tpu.memory_space<vmem>>, vector<1x128xf32>
    %4 = vector.broadcast %3 : vector<1x128xf32> to vector<128x128xf32>
    %5 = arith.addf %2, %4 : vector<128x128xf32>
    %cst_5 = arith.constant 0.000000e+00 : f32
    %6 = vector.broadcast %cst_5 : f32 to vector<128x128xf32>
    %7 = arith.maximumf %5, %6 : vector<128x128xf32>
    %8 = arith.truncf %7 : vector<128x128xf32> to vector<128x128xbf16>
    %c0_6 = arith.constant 0 : index
    %c0_7 = arith.constant 0 : index
    %9 = vector.load %arg4[%c0_6, %c0_7] : memref<128x128xbf16, #tpu.memory_space<vmem>>, vector<128x128xbf16>
    %cst_8 = arith.constant dense<0.000000e+00> : vector<128x128xf32>
    %10 = tpu.matmul %8, %9, %cst_8 {dimension_numbers = #tpu.dot_dimension_numbers<[1], [0], [0], [1], [0, 0, 1, 1], [], []>} : vector<128x128xbf16>, vector<128x128xbf16>, vector<128x128xf32> -> vector<128x128xf32>
    %c0_9 = arith.constant 0 : index
    %c0_10 = arith.constant 0 : index
    %11 = vector.load %arg5[%c0_9, %c0_10] : memref<1x128xf32, #tpu.memory_space<vmem>>, vector<1x128xf32>
    %12 = vector.broadcast %11 : vector<1x128xf32> to vector<128x128xf32>
    %13 = arith.addf %10, %12 : vector<128x128xf32>
    %cst_11 = arith.constant 0.000000e+00 : f32
    %14 = vector.broadcast %cst_11 : f32 to vector<128x128xf32>
    %15 = arith.maximumf %13, %14 : vector<128x128xf32>
    %16 = arith.truncf %15 : vector<128x128xf32> to vector<128x128xbf16>
    %c0_12 = arith.constant 0 : index
    %c0_13 = arith.constant 0 : index
    %17 = vector.load %arg6[%c0_12, %c0_13] : memref<128x128xbf16, #tpu.memory_space<vmem>>, vector<128x128xbf16>
    %cst_14 = arith.constant dense<0.000000e+00> : vector<128x128xf32>
    %18 = tpu.matmul %16, %17, %cst_14 {dimension_numbers = #tpu.dot_dimension_numbers<[1], [0], [0], [1], [0, 0, 1, 1], [], []>} : vector<128x128xbf16>, vector<128x128xbf16>, vector<128x128xf32> -> vector<128x128xf32>
    %c0_15 = arith.constant 0 : index
    %c0_16 = arith.constant 0 : index
    %19 = vector.load %arg7[%c0_15, %c0_16] : memref<1x128xf32, #tpu.memory_space<vmem>>, vector<1x128xf32>
    %20 = vector.broadcast %19 : vector<1x128xf32> to vector<128x128xf32>
    %21 = arith.addf %18, %20 : vector<128x128xf32>
    %c0_17 = arith.constant 0 : index
    %c0_18 = arith.constant 0 : index
    %22 = vector.load %arg8[%c0_17, %c0_18] : memref<128x128xf32, #tpu.memory_space<vmem>>, vector<128x128xf32>
    tpu.vector_store %arg8[%c0_17, %c0_18], %21 {strides = array<i32>} : memref<128x128xf32, #tpu.memory_space<vmem>>, vector<128x128xf32>,
    return
  }
  func.func @transform_0(%arg0: i32) -> (i32, i32) {
    %c0_i32 = arith.constant 0 : i32
    %c0_i32_0 = arith.constant 0 : i32
    return %arg0, %c0_i32 : i32, i32
  }
  func.func @transform_1(%arg0: i32) -> (i32, i32) {
    %c0_i32 = arith.constant 0 : i32
    %c0_i32_0 = arith.constant 0 : i32
    %c0_i32_1 = arith.constant 0 : i32
    return %c0_i32, %c0_i32_0 : i32, i32
  }
  func.func @transform_2(%arg0: i32) -> (i32, i32) {
    %c0_i32 = arith.constant 0 : i32
    %c0_i32_0 = arith.constant 0 : i32
    %c0_i32_1 = arith.constant 0 : i32
    return %c0_i32, %c0_i32_0 : i32, i32
  }
  func.func @transform_3(%arg0: i32) -> (i32, i32) {
    %c0_i32 = arith.constant 0 : i32
    %c0_i32_0 = arith.constant 0 : i32
    %c0_i32_1 = arith.constant 0 : i32
    return %c0_i32, %c0_i32_0 : i32, i32
  }
  func.func @transform_4(%arg0: i32) -> (i32, i32) {
    %c0_i32 = arith.constant 0 : i32
    %c0_i32_0 = arith.constant 0 : i32
    %c0_i32_1 = arith.constant 0 : i32
    return %c0_i32, %c0_i32_0 : i32, i32
  }
  func.func @transform_5(%arg0: i32) -> (i32, i32) {
    %c0_i32 = arith.constant 0 : i32
    %c0_i32_0 = arith.constant 0 : i32
    %c0_i32_1 = arith.constant 0 : i32
    return %c0_i32, %c0_i32_0 : i32, i32
  }
  func.func @transform_6(%arg0: i32) -> (i32, i32) {
    %c0_i32 = arith.constant 0 : i32
    %c0_i32_0 = arith.constant 0 : i32
    %c0_i32_1 = arith.constant 0 : i32
    return %c0_i32, %c0_i32_0 : i32, i32
  }
  func.func @transform_7(%arg0: i32) -> (i32, i32) {
    %c0_i32 = arith.constant 0 : i32
    %c0_i32_0 = arith.constant 0 : i32
    return %arg0, %c0_i32 : i32, i32
  }
}

</mosaic_0001>

<llo_original>
// kernel: tpu_custom_call.1
$region0: #{tpu_custom_call.1}
  #allocation0 [shape = 'u32[]', space=smem, size = 0x4, offset = 0x4, fixed_abs, tag = 'smem constant byte address 0x4 - core index']
  #allocation1 [shape = 'u32[144,128]{1,0:T(1,128)}', space=vmem, size = 0x12000, scoped, tag = 'internal scratch']
  %s0 = inlined_call_operand.hbm [shape: bf16[128,128], index: 0, kind: input, shape index: {}]
  %s1 = inlined_call_operand.hbm [shape: bf16[128,128], index: 1, kind: input, shape index: {}]
  %s2 = inlined_call_operand.vmem [shape: f32[1,128], index: 2, kind: input, shape index: {}]
  %s3 = inlined_call_operand.hbm [shape: bf16[128,128], index: 3, kind: input, shape index: {}]
  %s4 = inlined_call_operand.vmem [shape: f32[1,128], index: 4, kind: input, shape index: {}]
  %s5 = inlined_call_operand.hbm [shape: bf16[128,128], index: 5, kind: input, shape index: {}]
  %s6 = inlined_call_operand.vmem [shape: f32[1,128], index: 6, kind: input, shape index: {}]
  %s7 = inlined_call_operand.hbm [shape: f32[128,128], index: 7, kind: output, shape index: {}]
  %s8 = sld [smem:[#allocation0]]
  $region54: #{tpu_custom_call.1} parent=0
    _
  %s10 = ssub.s32 1, %s8
  %s11 = scalar_select 0, %s10, %s8
  $region1: #{tpu_custom_call.1} parent=0
    #allocation2 [shape = 'u8[32768]{0}', space=vmem, size = 0x8000, scoped, tag = 'input window, operand 0, single buffered']
    #allocation3 [shape = 's32[1]{0}', space=sflag, size = 0x4, scoped, tag = 'scoped memory for tpu_custom_call.1']
    #allocation4 [shape = 's32[1]{0}', space=sflag, size = 0x4, scoped, tag = 'scoped memory for tpu_custom_call.1']
    #allocation5 [shape = 'u8[32768]{0}', space=vmem, size = 0x8000, scoped, tag = 'input window, operand 1, single buffered']
    #allocation6 [shape = 's32[1]{0}', space=sflag, size = 0x4, scoped, tag = 'scoped memory for tpu_custom_call.1']
    #allocation7 [shape = 'u8[32768]{0}', space=vmem, size = 0x8000, scoped, tag = 'input window, operand 3, single buffered']
    #allocation8 [shape = 'u8[32768]{0}', space=vmem, size = 0x8000, scoped, tag = 'input window, operand 5, single buffered']
    #allocation9 [shape = 's32[1]{0}', space=sflag, size = 0x4, scoped, tag = 'scoped memory for tpu_custom_call.1']
    #allocation10 [shape = 'u8[65536]{0}', space=vmem, size = 0x10000, scoped, tag = 'output window, operand 0, single buffered']
    %12 = vsyncpa [#allocation3], 0
    %13 = vsyncpa [#allocation6], 0
    %14 = vsyncpa [#allocation9], 0
    %15 = vsyncpa [#allocation4], 0
    // Predicated region
    $region2: #{tpu_custom_call.1} parent=1 // pred_check
      _
    $region3: #{tpu_custom_call.1} parent=1 // pred_check_branch
      %17 = sbr.rel (0) target = $region5
    $region4: #{tpu_custom_call.1} parent=1 // pred_region
      %s19 = ssub.s32 1024, 1024
      %20 = vsyncadd [#allocation3], %s19
      %s21 = sshll.u32 [#allocation2], 4
      %s22 = int_to_ptr.vmem [resolvable:$true] %s21
      %27 = dma.hbm_to_vmem [thread:$0]  %s0, 1024, %s22, [#allocation3], 64, 64, 4
    $region5: #{tpu_custom_call.1} parent=1 // pred_fallthru
      _
    // Predicated region
    $region6: #{tpu_custom_call.1} parent=1 // pred_check
      _
    $region7: #{tpu_custom_call.1} parent=1 // pred_check_branch
      %29 = sbr.rel (0) target = $region9
    $region8: #{tpu_custom_call.1} parent=1 // pred_region
      %s31 = ssub.s32 1024, 1024
      %32 = vsyncadd [#allocation6], %s31
      %s33 = sshll.u32 [#allocation5], 4
      %s34 = int_to_ptr.vmem [resolvable:$true] %s33
      %39 = dma.hbm_to_vmem [thread:$0]  %s1, 1024, %s34, [#allocation6], 64, 64, 4
    $region9: #{tpu_custom_call.1} parent=1 // pred_fallthru
      _
    // Predicated region
    $region10: #{tpu_custom_call.1} parent=1 // pred_check
      _
    $region11: #{tpu_custom_call.1} parent=1 // pred_check_branch
      %41 = sbr.rel (0) target = $region13
    $region12: #{tpu_custom_call.1} parent=1 // pred_region
      _
    $region13: #{tpu_custom_call.1} parent=1 // pred_fallthru
      _
    // Predicated region
    $region14: #{tpu_custom_call.1} parent=1 // pred_check
      _
    $region15: #{tpu_custom_call.1} parent=1 // pred_check_branch
      %43 = sbr.rel (0) target = $region17
    $region16: #{tpu_custom_call.1} parent=1 // pred_region
      %s45 = ssub.s32 1024, 1024
      %46 = vsyncadd [#allocation6], %s45
      %s47 = sshll.u32 [#allocation7], 4
      %s48 = int_to_ptr.vmem [resolvable:$true] %s47
      %53 = dma.hbm_to_vmem [thread:$0]  %s3, 1024, %s48, [#allocation6], 64, 64, 4
    $region17: #{tpu_custom_call.1} parent=1 // pred_fallthru
      _
    // Predicated region
    $region18: #{tpu_custom_call.1} parent=1 // pred_check
      _
    $region19: #{tpu_custom_call.1} parent=1 // pred_check_branch
      %55 = sbr.rel (0) target = $region21
    $region20: #{tpu_custom_call.1} parent=1 // pred_region
      _
    $region21: #{tpu_custom_call.1} parent=1 // pred_fallthru
      _
    // Predicated region
    $region22: #{tpu_custom_call.1} parent=1 // pred_check
      _
    $region23: #{tpu_custom_call.1} parent=1 // pred_check_branch
      %57 = sbr.rel (0) target = $region25
    $region24: #{tpu_custom_call.1} parent=1 // pred_region
      %s59 = ssub.s32 1024, 1024
      %60 = vsyncadd [#allocation9], %s59
      %s61 = sshll.u32 [#allocation8], 4
      %s62 = int_to_ptr.vmem [resolvable:$true] %s61
      %67 = dma.hbm_to_vmem [thread:$0]  %s5, 1024, %s62, [#allocation9], 64, 64, 4
    $region25: #{tpu_custom_call.1} parent=1 // pred_fallthru
      _
    // Predicated region
    $region26: #{tpu_custom_call.1} parent=1 // pred_check
      _
    $region27: #{tpu_custom_call.1} parent=1 // pred_check_branch
      %69 = sbr.rel (0) target = $region29
    $region28: #{tpu_custom_call.1} parent=1 // pred_region
      _
    $region29: #{tpu_custom_call.1} parent=1 // pred_fallthru
      _
    // Predicated region
    $region30: #{tpu_custom_call.1} parent=1 // pred_check
      _
    $region31: #{tpu_custom_call.1} parent=1 // pred_check_branch
      %71 = sbr.rel (0) target = $region33
    $region32: #{tpu_custom_call.1} parent=1 // pred_region
      %72 = dma.done [#allocation3], 1024
    $region33: #{tpu_custom_call.1} parent=1 // pred_fallthru
      _
    // Predicated region
    $region34: #{tpu_custom_call.1} parent=1 // pred_check
      _
    $region35: #{tpu_custom_call.1} parent=1 // pred_check_branch
      %74 = sbr.rel (0) target = $region37
    $region36: #{tpu_custom_call.1} parent=1 // pred_region
      %75 = dma.done [#allocation6], 1024
    $region37: #{tpu_custom_call.1} parent=1 // pred_fallthru
      _
    // Predicated region
    $region38: #{tpu_custom_call.1} parent=1 // pred_check
      _
    $region39: #{tpu_custom_call.1} parent=1 // pred_check_branch
      %77 = sbr.rel (0) target = $region41
    $region40: #{tpu_custom_call.1} parent=1 // pred_region
      %78 = dma.done [#allocation6], 1024
    $region41: #{tpu_custom_call.1} parent=1 // pred_fallthru
      _
    // Predicated region
    $region42: #{tpu_custom_call.1} parent=1 // pred_check
      _
    $region43: #{tpu_custom_call.1} parent=1 // pred_check_branch
      %80 = sbr.rel (0) target = $region45
    $region44: #{tpu_custom_call.1} parent=1 // pred_region
      %81 = dma.done [#allocation9], 1024
    $region45: #{tpu_custom_call.1} parent=1 // pred_fallthru
      _
    %v83 = vld [vmem:[#allocation2] sm:$0xf]
    %v84 = vld [vmem:[#allocation2 + $0x4] sm:$0xf]
    %v85 = vld [vmem:[#allocation2 + $0x8] sm:$0xf]
    %v86 = vld [vmem:[#allocation2 + $0xc] sm:$0xf]
    %v87 = vld [vmem:[#allocation2 + $0x10] sm:$0xf]
    %v88 = vld [vmem:[#allocation2 + $0x14] sm:$0xf]
    %v89 = vld [vmem:[#allocation2 + $0x18] sm:$0xf]
    %v90 = vld [vmem:[#allocation2 + $0x1c] sm:$0xf]
    %v91 = vld [vmem:[#allocation2 + $0x20] sm:$0xf]
    %v92 = vld [vmem:[#allocation2 + $0x24] sm:$0xf]
    %v93 = vld [vmem:[#allocation2 + $0x28] sm:$0xf]
    %v94 = vld [vmem:[#allocation2 + $0x2c] sm:$0xf]
    %v95 = vld [vmem:[#allocation2 + $0x30] sm:$0xf]
    %v96 = vld [vmem:[#allocation2 + $0x34] sm:$0xf]
    %v97 = vld [vmem:[#allocation2 + $0x38] sm:$0xf]
    %v98 = vld [vmem:[#allocation2 + $0x3c] sm:$0xf]
    %v99 = vld [vmem:[#allocation5] sm:$0xf]
    %v100 = vld [vmem:[#allocation5 + $0x4] sm:$0xf]
    %v101 = vld [vmem:[#allocation5 + $0x8] sm:$0xf]
    %v102 = vld [vmem:[#allocation5 + $0xc] sm:$0xf]
    %v103 = vld [vmem:[#allocation5 + $0x10] sm:$0xf]
    %v104 = vld [vmem:[#allocation5 + $0x14] sm:$0xf]
    %v105 = vld [vmem:[#allocation5 + $0x18] sm:$0xf]
    %v106 = vld [vmem:[#allocation5 + $0x1c] sm:$0xf]
    %v107 = vld [vmem:[#allocation5 + $0x20] sm:$0xf]
    %v108 = vld [vmem:[#allocation5 + $0x24] sm:$0xf]
    %v109 = vld [vmem:[#allocation5 + $0x28] sm:$0xf]
    %v110 = vld [vmem:[#allocation5 + $0x2c] sm:$0xf]
    %v111 = vld [vmem:[#allocation5 + $0x30] sm:$0xf]
    %v112 = vld [vmem:[#allocation5 + $0x34] sm:$0xf]
    %v113 = vld [vmem:[#allocation5 + $0x38] sm:$0xf]
    %v114 = vld [vmem:[#allocation5 + $0x3c] sm:$0xf]
    %v115 = vld [vmem:[%s2] sm:$0x1]
    %v117 = vlaneseq
    %v118 = vshrl.u32 %v117, 7
    %v119 = vsub.s32 0, %v118
    %v120 = vrot.slane %v115, %v119
    %v138 = vunpack.c.l.b16 %v83
    %v139 = vunpack.c.l.b16 %v84
    %v140 = vunpack.c.l.b16 %v85
    %v141 = vunpack.c.l.b16 %v86
    %v142 = vunpack.c.l.b16 %v87
    %v143 = vunpack.c.l.b16 %v88
    %v144 = vunpack.c.l.b16 %v89
    %v145 = vunpack.c.l.b16 %v90
    %v146 = vunpack.c.l.b16 %v91
    %v147 = vunpack.c.l.b16 %v92
    %v148 = vunpack.c.l.b16 %v93
    %v149 = vunpack.c.l.b16 %v94
    %v150 = vunpack.c.l.b16 %v95
    %v151 = vunpack.c.l.b16 %v96
    %v152 = vunpack.c.l.b16 %v97
    %v153 = vunpack.c.l.b16 %v98
    %v154 = vpack.c.b16 %v139, %v138
    %v155 = vpack.c.b16 %v141, %v140
    %v156 = vpack.c.b16 %v143, %v142
    %v157 = vpack.c.b16 %v145, %v144
    %v158 = vpack.c.b16 %v147, %v146
    %v159 = vpack.c.b16 %v149, %v148
    %v160 = vpack.c.b16 %v151, %v150
    %v161 = vpack.c.b16 %v153, %v152
    %v186 = vunpack.c.l.b16 %v99
    %v187 = vunpack.c.l.b16 %v100
    %v188 = vunpack.c.l.b16 %v101
    %v189 = vunpack.c.l.b16 %v102
    %v190 = vunpack.c.l.b16 %v103
    %v191 = vunpack.c.l.b16 %v104
    %v192 = vunpack.c.l.b16 %v105
    %v193 = vunpack.c.l.b16 %v106
    %v194 = vunpack.c.l.b16 %v107
    %v195 = vunpack.c.l.b16 %v108
    %v196 = vunpack.c.l.b16 %v109
    %v197 = vunpack.c.l.b16 %v110
    %v198 = vunpack.c.l.b16 %v111
    %v199 = vunpack.c.l.b16 %v112
    %v200 = vunpack.c.l.b16 %v113
    %v201 = vunpack.c.l.b16 %v114
    %v202 = vpack.c.b16 %v187, %v186
    %v203 = vpack.c.b16 %v189, %v188
    %v204 = vpack.c.b16 %v191, %v190
    %v205 = vpack.c.b16 %v193, %v192
    %v206 = vpack.c.b16 %v195, %v194
    %v207 = vpack.c.b16 %v197, %v196
    %v208 = vpack.c.b16 %v199, %v198
    %v209 = vpack.c.b16 %v201, %v200
    %218 = vmatprep.subr.bf16.mxu0 0
    %219 = vmatpush1.bf16.msra.mxu0 %v209
    %220 = vmatprep.subr.bf16.mxu0 0
    %221 = vmatpush1.bf16.msra.mxu0 %v208
    %222 = vmatprep.subr.bf16.mxu0 0
    %223 = vmatpush1.bf16.msra.mxu0 %v207
    %224 = vmatprep.subr.bf16.mxu0 0
    %225 = vmatpush1.bf16.msra.mxu0 %v206
    %226 = vmatprep.subr.bf16.mxu0 0
    %227 = vmatpush1.bf16.msra.mxu0 %v205
    %228 = vmatprep.subr.bf16.mxu0 0
    %229 = vmatpush1.bf16.msra.mxu0 %v204
    %230 = vmatprep.subr.bf16.mxu0 0
    %231 = vmatpush1.bf16.msra.mxu0 %v203
    %232 = vmatprep.subr.bf16.mxu0 0
    %233 = vmatpush1.bf16.msra.mxu0 %v202
    %234 = vmatprep.subr.bf16.mxu0 0
    %235 = vmatpush2.bf16.msra.mxu0 0
    %236 = vmatprep.subr.bf16.mxu0 0
    %237 = vmatpush2.bf16.msra.mxu0 0
    %238 = vmatprep.subr.bf16.mxu0 0
    %239 = vmatpush2.bf16.msra.mxu0 0
    %240 = vmatprep.subr.bf16.mxu0 0
    %241 = vmatpush2.bf16.msra.mxu0 0
    %242 = vmatprep.subr.bf16.mxu0 0
    %243 = vmatpush2.bf16.msra.mxu0 0
    %244 = vmatprep.subr.bf16.mxu0 0
    %245 = vmatpush2.bf16.msra.mxu0 0
    %246 = vmatprep.subr.bf16.mxu0 0
    %247 = vmatpush2.bf16.msra.mxu0 0
    %248 = vmatprep.subr.bf16.mxu0 0
    %249 = vmatpush2.bf16.msra.mxu0 0
    %250 = vmatprep.mubr.bf16.mxu0 0
    %251 = vmatmul.mubr.bf16.gmra.mxu0 %v154
    %v252 = vpop.f32.mrf.mxu0
    %v253 = vadd.f32 %v120, %v252
    %v254 = vpop.f32.mrf.mxu0
    %v255 = vpop.f32.mrf.mxu0
    %v256 = vadd.f32 %v120, %v255
    %v257 = vpop.f32.mrf.mxu0
    %258 = vmatprep.mubr.bf16.mxu0 0
    %259 = vmatmul.mubr.bf16.gmra.mxu0 %v155
    %v260 = vpop.f32.mrf.mxu0
    %v261 = vadd.f32 %v120, %v260
    %v262 = vpop.f32.mrf.mxu0
    %v263 = vpop.f32.mrf.mxu0
    %v264 = vadd.f32 %v120, %v263
    %v265 = vpop.f32.mrf.mxu0
    %266 = vmatprep.mubr.bf16.mxu0 0
    %267 = vmatmul.mubr.bf16.gmra.mxu0 %v156
    %v268 = vpop.f32.mrf.mxu0
    %v269 = vadd.f32 %v120, %v268
    %v270 = vpop.f32.mrf.mxu0
    %v271 = vpop.f32.mrf.mxu0
    %v272 = vadd.f32 %v120, %v271
    %v273 = vpop.f32.mrf.mxu0
    %274 = vmatprep.mubr.bf16.mxu0 0
    %275 = vmatmul.mubr.bf16.gmra.mxu0 %v157
    %v276 = vpop.f32.mrf.mxu0
    %v277 = vadd.f32 %v120, %v276
    %v278 = vpop.f32.mrf.mxu0
    %v279 = vpop.f32.mrf.mxu0
    %v280 = vadd.f32 %v120, %v279
    %v281 = vpop.f32.mrf.mxu0
    %282 = vmatprep.mubr.bf16.mxu0 0
    %283 = vmatmul.mubr.bf16.gmra.mxu0 %v158
    %v284 = vpop.f32.mrf.mxu0
    %v285 = vadd.f32 %v120, %v284
    %v286 = vpop.f32.mrf.mxu0
    %v287 = vpop.f32.mrf.mxu0
    %v288 = vadd.f32 %v120, %v287
    %v289 = vpop.f32.mrf.mxu0
    %290 = vmatprep.mubr.bf16.mxu0 0
    %291 = vmatmul.mubr.bf16.gmra.mxu0 %v159
    %v292 = vpop.f32.mrf.mxu0
    %v293 = vadd.f32 %v120, %v292
    %v294 = vpop.f32.mrf.mxu0
    %v295 = vpop.f32.mrf.mxu0
    %v296 = vadd.f32 %v120, %v295
    %v297 = vpop.f32.mrf.mxu0
    %298 = vmatprep.mubr.bf16.mxu0 0
    %299 = vmatmul.mubr.bf16.gmra.mxu0 %v160
    %v300 = vpop.f32.mrf.mxu0
    %v301 = vadd.f32 %v120, %v300
    %v302 = vpop.f32.mrf.mxu0
    %v303 = vpop.f32.mrf.mxu0
    %v304 = vadd.f32 %v120, %v303
    %v305 = vpop.f32.mrf.mxu0
    %306 = vmatprep.mubr.bf16.mxu0 0
    %307 = vmatmul.mubr.bf16.gmra.mxu0 %v161
    %v308 = vpop.f32.mrf.mxu0
    %v309 = vadd.f32 %v120, %v308
    %v310 = vpop.f32.mrf.mxu0
    %v311 = vpop.f32.mrf.mxu0
    %v312 = vadd.f32 %v120, %v311
    %v313 = vpop.f32.mrf.mxu0
    %314 = vdwg.mxu0
    %v315 = vmax.f32 %v253, 0.0
    %v316 = vmax.f32 %v256, 0.0
    %v317 = vmax.f32 %v261, 0.0
    %v318 = vmax.f32 %v264, 0.0
    %v319 = vmax.f32 %v269, 0.0
    %v320 = vmax.f32 %v272, 0.0
    %v321 = vmax.f32 %v277, 0.0
    %v322 = vmax.f32 %v280, 0.0
    %v323 = vmax.f32 %v285, 0.0
    %v324 = vmax.f32 %v288, 0.0
    %v325 = vmax.f32 %v293, 0.0
    %v326 = vmax.f32 %v296, 0.0
    %v327 = vmax.f32 %v301, 0.0
    %v328 = vmax.f32 %v304, 0.0
    %v329 = vmax.f32 %v309, 0.0
    %v330 = vmax.f32 %v312, 0.0
    %v331 = vpack.c.bf16 %v316, %v315
    %v332 = vpack.c.bf16 %v318, %v317
    %v333 = vpack.c.bf16 %v320, %v319
    %v334 = vpack.c.bf16 %v322, %v321
    %v335 = vpack.c.bf16 %v324, %v323
    %v336 = vpack.c.bf16 %v326, %v325
    %v337 = vpack.c.bf16 %v328, %v327
    %v338 = vpack.c.bf16 %v330, %v329
    %v339 = vld [vmem:[#allocation7] sm:$0xf]
    %v340 = vld [vmem:[#allocation7 + $0x4] sm:$0xf]
    %v341 = vld [vmem:[#allocation7 + $0x8] sm:$0xf]
    %v342 = vld [vmem:[#allocation7 + $0xc] sm:$0xf]
    %v343 = vld [vmem:[#allocation7 + $0x10] sm:$0xf]
    %v344 = vld [vmem:[#allocation7 + $0x14] sm:$0xf]
    %v345 = vld [vmem:[#allocation7 + $0x18] sm:$0xf]
    %v346 = vld [vmem:[#allocation7 + $0x1c] sm:$0xf]
    %v347 = vld [vmem:[#allocation7 + $0x20] sm:$0xf]
    %v348 = vld [vmem:[#allocation7 + $0x24] sm:$0xf]
    %v349 = vld [vmem:[#allocation7 + $0x28] sm:$0xf]
    %v350 = vld [vmem:[#allocation7 + $0x2c] sm:$0xf]
    %v351 = vld [vmem:[#allocation7 + $0x30] sm:$0xf]
    %v352 = vld [vmem:[#allocation7 + $0x34] sm:$0xf]
    %v353 = vld [vmem:[#allocation7 + $0x38] sm:$0xf]
    %v354 = vld [vmem:[#allocation7 + $0x3c] sm:$0xf]
    %v355 = vld [vmem:[%s4] sm:$0x1]
    %v357 = vlaneseq
    %v358 = vshrl.u32 %v357, 7
    %v359 = vsub.s32 0, %v358
    %v360 = vrot.slane %v355, %v359
    %v378 = vunpack.c.l.b16 %v339
    %v379 = vunpack.c.l.b16 %v340
    %v380 = vunpack.c.l.b16 %v341
    %v381 = vunpack.c.l.b16 %v342
    %v382 = vunpack.c.l.b16 %v343
    %v383 = vunpack.c.l.b16 %v344
    %v384 = vunpack.c.l.b16 %v345
    %v385 = vunpack.c.l.b16 %v346
    %v386 = vunpack.c.l.b16 %v347
    %v387 = vunpack.c.l.b16 %v348
    %v388 = vunpack.c.l.b16 %v349
    %v389 = vunpack.c.l.b16 %v350
    %v390 = vunpack.c.l.b16 %v351
    %v391 = vunpack.c.l.b16 %v352
    %v392 = vunpack.c.l.b16 %v353
    %v393 = vunpack.c.l.b16 %v354
    %v394 = vpack.c.b16 %v379, %v378
    %v395 = vpack.c.b16 %v381, %v380
    %v396 = vpack.c.b16 %v383, %v382
    %v397 = vpack.c.b16 %v385, %v384
    %v398 = vpack.c.b16 %v387, %v386
    %v399 = vpack.c.b16 %v389, %v388
    %v400 = vpack.c.b16 %v391, %v390
    %v401 = vpack.c.b16 %v393, %v392
    %410 = vmatprep.subr.bf16.mxu0 0
    %411 = vmatpush1.bf16.msra.mxu0 %v401
    %412 = vmatprep.subr.bf16.mxu0 0
    %413 = vmatpush1.bf16.msra.mxu0 %v400
    %414 = vmatprep.subr.bf16.mxu0 0
    %415 = vmatpush1.bf16.msra.mxu0 %v399
    %416 = vmatprep.subr.bf16.mxu0 0
    %417 = vmatpush1.bf16.msra.mxu0 %v398
    %418 = vmatprep.subr.bf16.mxu0 0
    %419 = vmatpush1.bf16.msra.mxu0 %v397
    %420 = vmatprep.subr.bf16.mxu0 0
    %421 = vmatpush1.bf16.msra.mxu0 %v396
    %422 = vmatprep.subr.bf16.mxu0 0
    %423 = vmatpush1.bf16.msra.mxu0 %v395
    %424 = vmatprep.subr.bf16.mxu0 0
    %425 = vmatpush1.bf16.msra.mxu0 %v394
    %426 = vmatprep.subr.bf16.mxu0 0
    %427 = vmatpush2.bf16.msra.mxu0 0
    %428 = vmatprep.subr.bf16.mxu0 0
    %429 = vmatpush2.bf16.msra.mxu0 0
    %430 = vmatprep.subr.bf16.mxu0 0
    %431 = vmatpush2.bf16.msra.mxu0 0
    %432 = vmatprep.subr.bf16.mxu0 0
    %433 = vmatpush2.bf16.msra.mxu0 0
    %434 = vmatprep.subr.bf16.mxu0 0
    %435 = vmatpush2.bf16.msra.mxu0 0
    %436 = vmatprep.subr.bf16.mxu0 0
    %437 = vmatpush2.bf16.msra.mxu0 0
    %438 = vmatprep.subr.bf16.mxu0 0
    %439 = vmatpush2.bf16.msra.mxu0 0
    %440 = vmatprep.subr.bf16.mxu0 0
    %441 = vmatpush2.bf16.msra.mxu0 0
    %442 = vmatprep.mubr.bf16.mxu0 0
    %443 = vmatmul.mubr.bf16.gmra.mxu0 %v331
    %v444 = vpop.f32.mrf.mxu0
    %v445 = vadd.f32 %v360, %v444
    %v446 = vpop.f32.mrf.mxu0
    %v447 = vpop.f32.mrf.mxu0
    %v448 = vadd.f32 %v360, %v447
    %v449 = vpop.f32.mrf.mxu0
    %450 = vmatprep.mubr.bf16.mxu0 0
    %451 = vmatmul.mubr.bf16.gmra.mxu0 %v332
    %v452 = vpop.f32.mrf.mxu0
    %v453 = vadd.f32 %v360, %v452
    %v454 = vpop.f32.mrf.mxu0
    %v455 = vpop.f32.mrf.mxu0
    %v456 = vadd.f32 %v360, %v455
    %v457 = vpop.f32.mrf.mxu0
    %458 = vmatprep.mubr.bf16.mxu0 0
    %459 = vmatmul.mubr.bf16.gmra.mxu0 %v333
    %v460 = vpop.f32.mrf.mxu0
    %v461 = vadd.f32 %v360, %v460
    %v462 = vpop.f32.mrf.mxu0
    %v463 = vpop.f32.mrf.mxu0
    %v464 = vadd.f32 %v360, %v463
    %v465 = vpop.f32.mrf.mxu0
    %466 = vmatprep.mubr.bf16.mxu0 0
    %467 = vmatmul.mubr.bf16.gmra.mxu0 %v334
    %v468 = vpop.f32.mrf.mxu0
    %v469 = vadd.f32 %v360, %v468
    %v470 = vpop.f32.mrf.mxu0
    %v471 = vpop.f32.mrf.mxu0
    %v472 = vadd.f32 %v360, %v471
    %v473 = vpop.f32.mrf.mxu0
    %474 = vmatprep.mubr.bf16.mxu0 0
    %475 = vmatmul.mubr.bf16.gmra.mxu0 %v335
    %v476 = vpop.f32.mrf.mxu0
    %v477 = vadd.f32 %v360, %v476
    %v478 = vpop.f32.mrf.mxu0
    %v479 = vpop.f32.mrf.mxu0
    %v480 = vadd.f32 %v360, %v479
    %v481 = vpop.f32.mrf.mxu0
    %482 = vmatprep.mubr.bf16.mxu0 0
    %483 = vmatmul.mubr.bf16.gmra.mxu0 %v336
    %v484 = vpop.f32.mrf.mxu0
    %v485 = vadd.f32 %v360, %v484
    %v486 = vpop.f32.mrf.mxu0
    %v487 = vpop.f32.mrf.mxu0
    %v488 = vadd.f32 %v360, %v487
    %v489 = vpop.f32.mrf.mxu0
    %490 = vmatprep.mubr.bf16.mxu0 0
    %491 = vmatmul.mubr.bf16.gmra.mxu0 %v337
    %v492 = vpop.f32.mrf.mxu0
    %v493 = vadd.f32 %v360, %v492
    %v494 = vpop.f32.mrf.mxu0
    %v495 = vpop.f32.mrf.mxu0
    %v496 = vadd.f32 %v360, %v495
    %v497 = vpop.f32.mrf.mxu0
    %498 = vmatprep.mubr.bf16.mxu0 0
    %499 = vmatmul.mubr.bf16.gmra.mxu0 %v338
    %v500 = vpop.f32.mrf.mxu0
    %v501 = vadd.f32 %v360, %v500
    %v502 = vpop.f32.mrf.mxu0
    %v503 = vpop.f32.mrf.mxu0
    %v504 = vadd.f32 %v360, %v503
    %v505 = vpop.f32.mrf.mxu0
    %506 = vdwg.mxu0
    %v507 = vmax.f32 %v445, 0.0
    %v508 = vmax.f32 %v448, 0.0
    %v509 = vmax.f32 %v453, 0.0
    %v510 = vmax.f32 %v456, 0.0
    %v511 = vmax.f32 %v461, 0.0
    %v512 = vmax.f32 %v464, 0.0
    %v513 = vmax.f32 %v469, 0.0
    %v514 = vmax.f32 %v472, 0.0
    %v515 = vmax.f32 %v477, 0.0
    %v516 = vmax.f32 %v480, 0.0
    %v517 = vmax.f32 %v485, 0.0
    %v518 = vmax.f32 %v488, 0.0
    %v519 = vmax.f32 %v493, 0.0
    %v520 = vmax.f32 %v496, 0.0
    %v521 = vmax.f32 %v501, 0.0
    %v522 = vmax.f32 %v504, 0.0
    %v523 = vpack.c.bf16 %v508, %v507
    %v524 = vpack.c.bf16 %v510, %v509
    %v525 = vpack.c.bf16 %v512, %v511
    %v526 = vpack.c.bf16 %v514, %v513
    %v527 = vpack.c.bf16 %v516, %v515
    %v528 = vpack.c.bf16 %v518, %v517
    %v529 = vpack.c.bf16 %v520, %v519
    %v530 = vpack.c.bf16 %v522, %v521
    %v531 = vld [vmem:[#allocation8] sm:$0xf]
    %v532 = vld [vmem:[#allocation8 + $0x4] sm:$0xf]
    %v533 = vld [vmem:[#allocation8 + $0x8] sm:$0xf]
    %v534 = vld [vmem:[#allocation8 + $0xc] sm:$0xf]
    %v535 = vld [vmem:[#allocation8 + $0x10] sm:$0xf]
    %v536 = vld [vmem:[#allocation8 + $0x14] sm:$0xf]
    %v537 = vld [vmem:[#allocation8 + $0x18] sm:$0xf]
    %v538 = vld [vmem:[#allocation8 + $0x1c] sm:$0xf]
    %v539 = vld [vmem:[#allocation8 + $0x20] sm:$0xf]
    %v540 = vld [vmem:[#allocation8 + $0x24] sm:$0xf]
    %v541 = vld [vmem:[#allocation8 + $0x28] sm:$0xf]
    %v542 = vld [vmem:[#allocation8 + $0x2c] sm:$0xf]
    %v543 = vld [vmem:[#allocation8 + $0x30] sm:$0xf]
    %v544 = vld [vmem:[#allocation8 + $0x34] sm:$0xf]
    %v545 = vld [vmem:[#allocation8 + $0x38] sm:$0xf]
    %v546 = vld [vmem:[#allocation8 + $0x3c] sm:$0xf]
    %v547 = vld [vmem:[%s6] sm:$0x1]
    %v549 = vlaneseq
    %v550 = vshrl.u32 %v549, 7
    %v551 = vsub.s32 0, %v550
    %v552 = vrot.slane %v547, %v551
    %v570 = vunpack.c.l.b16 %v531
    %v571 = vunpack.c.l.b16 %v532
    %v572 = vunpack.c.l.b16 %v533
    %v573 = vunpack.c.l.b16 %v534
    %v574 = vunpack.c.l.b16 %v535
    %v575 = vunpack.c.l.b16 %v536
    %v576 = vunpack.c.l.b16 %v537
    %v577 = vunpack.c.l.b16 %v538
    %v578 = vunpack.c.l.b16 %v539
    %v579 = vunpack.c.l.b16 %v540
    %v580 = vunpack.c.l.b16 %v541
    %v581 = vunpack.c.l.b16 %v542
    %v582 = vunpack.c.l.b16 %v543
    %v583 = vunpack.c.l.b16 %v544
    %v584 = vunpack.c.l.b16 %v545
    %v585 = vunpack.c.l.b16 %v546
    %v586 = vpack.c.b16 %v571, %v570
    %v587 = vpack.c.b16 %v573, %v572
    %v588 = vpack.c.b16 %v575, %v574
    %v589 = vpack.c.b16 %v577, %v576
    %v590 = vpack.c.b16 %v579, %v578
    %v591 = vpack.c.b16 %v581, %v580
    %v592 = vpack.c.b16 %v583, %v582
    %v593 = vpack.c.b16 %v585, %v584
    %602 = vmatprep.subr.bf16.mxu0 0
    %603 = vmatpush1.bf16.msra.mxu0 %v593
    %604 = vmatprep.subr.bf16.mxu0 0
    %605 = vmatpush1.bf16.msra.mxu0 %v592
    %606 = vmatprep.subr.bf16.mxu0 0
    %607 = vmatpush1.bf16.msra.mxu0 %v591
    %608 = vmatprep.subr.bf16.mxu0 0
    %609 = vmatpush1.bf16.msra.mxu0 %v590
    %610 = vmatprep.subr.bf16.mxu0 0
    %611 = vmatpush1.bf16.msra.mxu0 %v589
    %612 = vmatprep.subr.bf16.mxu0 0
    %613 = vmatpush1.bf16.msra.mxu0 %v588
    %614 = vmatprep.subr.bf16.mxu0 0
    %615 = vmatpush1.bf16.msra.mxu0 %v587
    %616 = vmatprep.subr.bf16.mxu0 0
    %617 = vmatpush1.bf16.msra.mxu0 %v586
    %618 = vmatprep.subr.bf16.mxu0 0
    %619 = vmatpush2.bf16.msra.mxu0 0
    %620 = vmatprep.subr.bf16.mxu0 0
    %621 = vmatpush2.bf16.msra.mxu0 0
    %622 = vmatprep.subr.bf16.mxu0 0
    %623 = vmatpush2.bf16.msra.mxu0 0
    %624 = vmatprep.subr.bf16.mxu0 0
    %625 = vmatpush2.bf16.msra.mxu0 0
    %626 = vmatprep.subr.bf16.mxu0 0
    %627 = vmatpush2.bf16.msra.mxu0 0
    %628 = vmatprep.subr.bf16.mxu0 0
    %629 = vmatpush2.bf16.msra.mxu0 0
    %630 = vmatprep.subr.bf16.mxu0 0
    %631 = vmatpush2.bf16.msra.mxu0 0
    %632 = vmatprep.subr.bf16.mxu0 0
    %633 = vmatpush2.bf16.msra.mxu0 0
    %634 = vmatprep.mubr.bf16.mxu0 0
    %635 = vmatmul.mubr.bf16.gmra.mxu0 %v523
    %v636 = vpop.f32.mrf.mxu0
    %v637 = vadd.f32 %v552, %v636
    %v638 = vpop.f32.mrf.mxu0
    %v639 = vpop.f32.mrf.mxu0
    %v640 = vadd.f32 %v552, %v639
    %v641 = vpop.f32.mrf.mxu0
    %642 = vmatprep.mubr.bf16.mxu0 0
    %643 = vmatmul.mubr.bf16.gmra.mxu0 %v524
    %v644 = vpop.f32.mrf.mxu0
    %v645 = vadd.f32 %v552, %v644
    %v646 = vpop.f32.mrf.mxu0
    %v647 = vpop.f32.mrf.mxu0
    %v648 = vadd.f32 %v552, %v647
    %v649 = vpop.f32.mrf.mxu0
    %650 = vmatprep.mubr.bf16.mxu0 0
    %651 = vmatmul.mubr.bf16.gmra.mxu0 %v525
    %v652 = vpop.f32.mrf.mxu0
    %v653 = vadd.f32 %v552, %v652
    %v654 = vpop.f32.mrf.mxu0
    %v655 = vpop.f32.mrf.mxu0
    %v656 = vadd.f32 %v552, %v655
    %v657 = vpop.f32.mrf.mxu0
    %658 = vmatprep.mubr.bf16.mxu0 0
    %659 = vmatmul.mubr.bf16.gmra.mxu0 %v526
    %v660 = vpop.f32.mrf.mxu0
    %v661 = vadd.f32 %v552, %v660
    %v662 = vpop.f32.mrf.mxu0
    %v663 = vpop.f32.mrf.mxu0
    %v664 = vadd.f32 %v552, %v663
    %v665 = vpop.f32.mrf.mxu0
    %666 = vmatprep.mubr.bf16.mxu0 0
    %667 = vmatmul.mubr.bf16.gmra.mxu0 %v527
    %v668 = vpop.f32.mrf.mxu0
    %v669 = vadd.f32 %v552, %v668
    %v670 = vpop.f32.mrf.mxu0
    %v671 = vpop.f32.mrf.mxu0
    %v672 = vadd.f32 %v552, %v671
    %v673 = vpop.f32.mrf.mxu0
    %674 = vmatprep.mubr.bf16.mxu0 0
    %675 = vmatmul.mubr.bf16.gmra.mxu0 %v528
    %v676 = vpop.f32.mrf.mxu0
    %v677 = vadd.f32 %v552, %v676
    %v678 = vpop.f32.mrf.mxu0
    %v679 = vpop.f32.mrf.mxu0
    %v680 = vadd.f32 %v552, %v679
    %v681 = vpop.f32.mrf.mxu0
    %682 = vmatprep.mubr.bf16.mxu0 0
    %683 = vmatmul.mubr.bf16.gmra.mxu0 %v529
    %v684 = vpop.f32.mrf.mxu0
    %v685 = vadd.f32 %v552, %v684
    %v686 = vpop.f32.mrf.mxu0
    %v687 = vpop.f32.mrf.mxu0
    %v688 = vadd.f32 %v552, %v687
    %v689 = vpop.f32.mrf.mxu0
    %690 = vmatprep.mubr.bf16.mxu0 0
    %691 = vmatmul.mubr.bf16.gmra.mxu0 %v530
    %v692 = vpop.f32.mrf.mxu0
    %v693 = vadd.f32 %v552, %v692
    %v694 = vpop.f32.mrf.mxu0
    %v695 = vpop.f32.mrf.mxu0
    %v696 = vadd.f32 %v552, %v695
    %v697 = vpop.f32.mrf.mxu0
    %698 = vdwg.mxu0
    %699 = vst [vmem:[#allocation10] sm:$0xff] %v637
    %700 = vst [vmem:[#allocation10 + $0x8] sm:$0xff] %v640
    %701 = vst [vmem:[#allocation10 + $0x10] sm:$0xff] %v645
    %702 = vst [vmem:[#allocation10 + $0x18] sm:$0xff] %v648
    %703 = vst [vmem:[#allocation10 + $0x20] sm:$0xff] %v653
    %704 = vst [vmem:[#allocation10 + $0x28] sm:$0xff] %v656
    %705 = vst [vmem:[#allocation10 + $0x30] sm:$0xff] %v661
    %706 = vst [vmem:[#allocation10 + $0x38] sm:$0xff] %v664
    %707 = vst [vmem:[#allocation10 + $0x40] sm:$0xff] %v669
    %708 = vst [vmem:[#allocation10 + $0x48] sm:$0xff] %v672
    %709 = vst [vmem:[#allocation10 + $0x50] sm:$0xff] %v677
    %710 = vst [vmem:[#allocation10 + $0x58] sm:$0xff] %v680
    %711 = vst [vmem:[#allocation10 + $0x60] sm:$0xff] %v685
    %712 = vst [vmem:[#allocation10 + $0x68] sm:$0xff] %v688
    %713 = vst [vmem:[#allocation10 + $0x70] sm:$0xff] %v693
    %714 = vst [vmem:[#allocation10 + $0x78] sm:$0xff] %v696
    // Predicated region
    $region46: #{tpu_custom_call.1} parent=1 // pred_check
      _
    $region47: #{tpu_custom_call.1} parent=1 // pred_check_branch
      %716 = sbr.rel (0) target = $region49
    $region48: #{tpu_custom_call.1} parent=1 // pred_region
      %s718 = ssub.s32 2048, 2048
      %719 = vsyncadd [#allocation4], %s718
      %s720 = sshll.u32 [#allocation10], 4
      %s721 = int_to_ptr.vmem [resolvable:$true] %s720
      %726 = dma.vmem_to_hbm [thread:$0]  %s721, 2048, %s7, [#allocation4], 128, 128, 8
    $region49: #{tpu_custom_call.1} parent=1 // pred_fallthru
      _
    // Predicated region
    $region50: #{tpu_custom_call.1} parent=1 // pred_check
      _
    $region51: #{tpu_custom_call.1} parent=1 // pred_check_branch
      %728 = sbr.rel (0) target = $region53
    $region52: #{tpu_custom_call.1} parent=1 // pred_region
      %729 = dma.done [#allocation4], 2048
    $region53: #{tpu_custom_call.1} parent=1 // pred_fallthru
      _
    %730 = vsyncpa [#allocation3], 1
    %731 = vsyncpa [#allocation6], 1
    %732 = vsyncpa [#allocation9], 1
    %733 = vsyncpa [#allocation4], 1

</llo_original>
